<compile_context>
chip_gen: v6e
topology: v6e:2x2x1
jax: 0.10.0
libtpu: 0.0.40
codegen_flags: <defaults>
</compile_context>

<pallas_src>
import functools

import jax
import jax.numpy as jnp
from jax.experimental import pallas as pl
from jax.experimental.pallas import tpu as pltpu


def _squeeze_excite_kernel(x_ref, w1t_ref, w2_ref, gate_ref, acc_ref, *, inv_hw):
    """Per-batch spatial mean -> Linear -> ReLU -> Linear -> sigmoid gate.

    x_ref:    (1, C, hw_tile)  current spatial tile of one batch element
    w1t_ref:  (C, Hd)          full1.weight.T
    w2_ref:   (C, Hd)          full2.weight
    gate_ref: (1, C, 1)        f32 gate output (written on last spatial tile)
    acc_ref:  (C, 1)           f32 running spatial sum (VMEM scratch)
    """
    hw_idx = pl.program_id(1)

    @pl.when(hw_idx == 0)
    def _():
        acc_ref[...] = jnp.zeros_like(acc_ref)

    # Only the reduction operand is promoted to f32 (per-tile, transient);
    # the big rescale pass stays in the input dtype.
    x = x_ref[0].astype(jnp.float32)                           # (C, hw_tile)
    acc_ref[...] += jnp.sum(x, axis=-1, keepdims=True)         # (C, 1)

    @pl.when(hw_idx == pl.num_programs(1) - 1)
    def _():
        y = acc_ref[...] * inv_hw                              # (C, 1) mean over true HW
        # Excitation on the VPU/XLU with C kept on sublanes (no relayout);
        # these are a few hundred FLOPs, not worth the MXU.
        h = jnp.sum(w1t_ref[...] * y, axis=0, keepdims=True)   # (1, Hd) = (W1 @ y).T
        h = jnp.maximum(h, 0.0)
        s = jnp.sum(w2_ref[...] * h, axis=1, keepdims=True)    # (C, 1) = W2 @ h
        gate_ref[...] = jax.nn.sigmoid(s)[None]                # (1, C, 1)


def _scale_kernel(x_ref, gate_ref, o_ref):
    """o = x * gate, gate broadcast over the spatial (lane) axis, in x's dtype."""
    x = x_ref[...]                                             # (1, C, hw_tile)
    o_ref[...] = x * gate_ref[...].astype(x.dtype)             # gate: (1, C, 1)


def se_layer_forward(x_nchw, w1, w2, *, block_bytes=4 * 1024 * 1024):
    """SE_Layer forward.

    x_nchw: (B, C, H, W); w1: (Hd, C) = full1.weight; w2: (C, Hd) = full2.weight
    (torch nn.Linear layout, bias-free).
    """
    B, C, H, W = x_nchw.shape
    Hd = w1.shape[0]
    assert w1.shape == (Hd, C) and w2.shape == (C, Hd)
    HW = H * W
    itemsize = jnp.dtype(x_nchw.dtype).itemsize

    # Lane-dense spatial tile: a multiple of 128, sized so one (C, hw_tile)
    # block is ~block_bytes. With double-buffered input + output tiles this
    # stays well inside a 32 MiB scoped VMEM budget on every TPU generation.
    max_lanes = max(128, (block_bytes // max(1, C * itemsize)) // 128 * 128)
    hw_tile = min(pl.cdiv(HW, 128) * 128, max_lanes)
    HW_pad = pl.cdiv(HW, hw_tile) * hw_tile
    n_hw = HW_pad // hw_tile

    x_flat = x_nchw.reshape(B, C, HW)
    if HW_pad != HW:
        # Zero padding keeps the spatial sum exact; the mean divides by the
        # true HW. Padded lanes are sliced away after the scale pass.
        x_flat = jnp.pad(x_flat, ((0, 0), (0, 0), (0, HW_pad - HW)))

    vmem_limit = 32 * 1024 * 1024

    # ---- Pass 1: squeeze (global average pool) + excitation -> gate ----
    gate = pl.pallas_call(
        functools.partial(_squeeze_excite_kernel, inv_hw=1.0 / HW),
        out_shape=jax.ShapeDtypeStruct((B, C, 1), jnp.float32),
        grid_spec=pltpu.PrefetchScalarGridSpec(
            num_scalar_prefetch=0,
            grid=(B, n_hw),
            in_specs=[
                pl.BlockSpec((1, C, hw_tile), lambda b, h: (b, 0, h)),
                pl.BlockSpec((C, Hd), lambda b, h: (0, 0)),
                pl.BlockSpec((C, Hd), lambda b, h: (0, 0)),
            ],
            out_specs=pl.BlockSpec((1, C, 1), lambda b, h: (b, 0, 0)),
            scratch_shapes=[pltpu.VMEM((C, 1), jnp.float32)],
        ),
        compiler_params=pltpu.CompilerParams(
            dimension_semantics=("parallel", "arbitrary"),
            vmem_limit_bytes=vmem_limit,
        ),
    )(x_flat, w1.T, w2)

    # ---- Pass 2: channel-wise rescale of x (HBM-bandwidth-bound pass) ----
    # TODO(synk): if the caller donates x, add input_output_aliases={0: 0} so
    # the output reuses x's HBM buffer.
    out_pad = pl.pallas_call(
        _scale_kernel,
        out_shape=jax.ShapeDtypeStruct((B, C, HW_pad), x_nchw.dtype),
        grid_spec=pltpu.PrefetchScalarGridSpec(
            num_scalar_prefetch=0,
            grid=(B, n_hw),
            in_specs=[
                pl.BlockSpec((1, C, hw_tile), lambda b, h: (b, 0, h)),
                pl.BlockSpec((1, C, 1), lambda b, h: (b, 0, 0)),
            ],
            out_specs=pl.BlockSpec((1, C, hw_tile), lambda b, h: (b, 0, h)),
        ),
        compiler_params=pltpu.CompilerParams(
            dimension_semantics=("parallel", "parallel"),
            vmem_limit_bytes=vmem_limit,
        ),
    )(x_flat, gate)

    if HW_pad != HW:
        out_pad = out_pad[:, :, :HW]
    return out_pad.reshape(B, C, H, W)


def _reference(x, w1, w2):
    y = jnp.mean(x.astype(jnp.float32), axis=(2, 3))
    h = jnp.maximum(y @ w1.T, 0.0)
    s = jax.nn.sigmoid(h @ w2.T)
    return x * s[:, :, None, None].astype(x.dtype)


if __name__ == "__main__":
    key = jax.random.PRNGKey(0)

    # Case 1: lane-aligned spatial size (planes=32, reduction=4, 16x16 maps).
    B, C, H, W, red = 2, 32, 16, 16, 4
    Hd = C // red
    kx, k1, k2, key = jax.random.split(key, 4)
    x = jax.random.normal(kx, (B, C, H, W), dtype=jnp.float32)
    b1, b2 = 1.0 / (C ** 0.5), 1.0 / (Hd ** 0.5)
    w1 = jax.random.uniform(k1, (Hd, C), jnp.float32, -b1, b1)   # full1.weight
    w2 = jax.random.uniform(k2, (C, Hd), jnp.float32, -b2, b2)   # full2.weight
    out = jax.block_until_ready(se_layer_forward(x, w1, w2))
    assert jnp.allclose(out, _reference(x, w1, w2), atol=1e-5, rtol=1e-5)

    # Case 2: non-multiple-of-128 spatial size exercises the padding path.
    B, C, H, W, red = 3, 16, 7, 7, 4
    Hd = C // red
    kx, k1, k2, key = jax.random.split(key, 4)
    x = jax.random.normal(kx, (B, C, H, W), dtype=jnp.float32)
    b1, b2 = 1.0 / (C ** 0.5), 1.0 / (Hd ** 0.5)
    w1 = jax.random.uniform(k1, (Hd, C), jnp.float32, -b1, b1)
    w2 = jax.random.uniform(k2, (C, Hd), jnp.float32, -b2, b2)
    out = jax.block_until_ready(se_layer_forward(x, w1, w2))
    assert jnp.allclose(out, _reference(x, w1, w2), atol=1e-5, rtol=1e-5)

    print("KERNEL_OK")
</pallas_src>

<mosaic_0001>
module attributes {stable_mosaic.version = 11 : i64} {
  func.func @_squeeze_excite_kernel(%arg0: i32, %arg1: i32, %arg2: memref<1x32x256xf32, #tpu.memory_space<vmem>>, %arg3: memref<32x8xf32, #tpu.memory_space<vmem>>, %arg4: memref<32x8xf32, #tpu.memory_space<vmem>>, %arg5: memref<1x32x1xf32, #tpu.memory_space<vmem>>, %arg6: memref<32x1xf32, #tpu.memory_space<vmem>>) attributes {dimension_semantics = [#tpu.dimension_semantics<parallel>, #tpu.dimension_semantics<arbitrary>], iteration_bounds = array<i64: 2, 1>, scalar_prefetch = 0 : i64, scratch_operands = 1 : i64, tpu.core_type = #tpu.core_type<tc>, window_params = [{transform_indices = @transform_0, window_bounds = array<i64: 1, 32, 256>}, {pipeline_mode = #tpu.pipeline_mode<synchronous>, transform_indices = @transform_1, window_bounds = array<i64: 32, 8>}, {pipeline_mode = #tpu.pipeline_mode<synchronous>, transform_indices = @transform_2, window_bounds = array<i64: 32, 8>}, {transform_indices = @transform_3, window_bounds = array<i64: 1, 32, 1>}]} {
    %c0_i32 = arith.constant 0 : i32
    %0 = arith.cmpi eq, %arg1, %c0_i32 : i32
    %1 = arith.extui %0 : i1 to i32
    %c0_i32_0 = arith.constant 0 : i32
    %2 = arith.cmpi ne, %1, %c0_i32_0 : i32
    scf.if %2 {
      %cst_9 = arith.constant 0.000000e+00 : f32
      %13 = vector.broadcast %cst_9 : f32 to vector<32x1xf32>
      %c0_10 = arith.constant 0 : index
      %c0_11 = arith.constant 0 : index
      %14 = vector.load %arg6[%c0_10, %c0_11] : memref<32x1xf32, #tpu.memory_space<vmem>>, vector<32x1xf32>
      tpu.vector_store %arg6[%c0_10, %c0_11], %13 {strides = array<i32>} : memref<32x1xf32, #tpu.memory_space<vmem>>, vector<32x1xf32>,
    } else {
    }
    %c0 = arith.constant 0 : index
    %c0_1 = arith.constant 0 : index
    %c0_2 = arith.constant 0 : index
    %3 = vector.load %arg2[%c0, %c0_1, %c0_2] : memref<1x32x256xf32, #tpu.memory_space<vmem>>, vector<1x32x256xf32>
    %4 = vector.shape_cast %3 : vector<1x32x256xf32> to vector<32x256xf32>
    %c0_3 = arith.constant 0 : index
    %c0_4 = arith.constant 0 : index
    %5 = vector.load %arg6[%c0_3, %c0_4] : memref<32x1xf32, #tpu.memory_space<vmem>>, vector<32x1xf32>
    %cst = arith.constant dense<0.000000e+00> : vector<32xf32>
    %6 = vector.multi_reduction <add>, %4, %cst [1] : vector<32x256xf32> to vector<32xf32>
    %7 = vector.shape_cast %6 : vector<32xf32> to vector<32x1xf32>
    %8 = arith.addf %5, %7 : vector<32x1xf32>
    %c0_5 = arith.constant 0 : index
    %c0_6 = arith.constant 0 : index
    %9 = vector.load %arg6[%c0_5, %c0_6] : memref<32x1xf32, #tpu.memory_space<vmem>>, vector<32x1xf32>
    tpu.vector_store %arg6[%c0_5, %c0_6], %8 {strides = array<i32>} : memref<32x1xf32, #tpu.memory_space<vmem>>, vector<32x1xf32>,
    %c0_i32_7 = arith.constant 0 : i32
    %10 = arith.cmpi eq, %arg1, %c0_i32_7 : i32
    %11 = arith.extui %10 : i1 to i32
    %c0_i32_8 = arith.constant 0 : i32
    %12 = arith.cmpi ne, %11, %c0_i32_8 : i32
    scf.if %12 {
      %c0_9 = arith.constant 0 : index
      %c0_10 = arith.constant 0 : index
      %13 = vector.load %arg6[%c0_9, %c0_10] : memref<32x1xf32, #tpu.memory_space<vmem>>, vector<32x1xf32>
      %cst_11 = arith.constant 3.906250e-03 : f32
      %14 = vector.broadcast %cst_11 : f32 to vector<32x1xf32>
      %15 = arith.mulf %13, %14 : vector<32x1xf32>
      %c0_12 = arith.constant 0 : index
      %c0_13 = arith.constant 0 : index
      %16 = vector.load %arg3[%c0_12, %c0_13] : memref<32x8xf32, #tpu.memory_space<vmem>>, vector<32x8xf32>
      %17 = vector.broadcast %15 : vector<32x1xf32> to vector<32x8xf32>
      %18 = arith.mulf %16, %17 : vector<32x8xf32>
      %cst_14 = arith.constant dense<0.000000e+00> : vector<8xf32>
      %19 = vector.multi_reduction <add>, %18, %cst_14 [0] : vector<32x8xf32> to vector<8xf32>
      %20 = vector.shape_cast %19 : vector<8xf32> to vector<1x8xf32>
      %cst_15 = arith.constant 0.000000e+00 : f32
      %21 = vector.broadcast %cst_15 : f32 to vector<1x8xf32>
      %22 = arith.maximumf %20, %21 : vector<1x8xf32>
      %c0_16 = arith.constant 0 : index
      %c0_17 = arith.constant 0 : index
      %23 = vector.load %arg4[%c0_16, %c0_17] : memref<32x8xf32, #tpu.memory_space<vmem>>, vector<32x8xf32>
      %24 = vector.broadcast %22 : vector<1x8xf32> to vector<32x8xf32>
      %25 = arith.mulf %23, %24 : vector<32x8xf32>
      %cst_18 = arith.constant dense<0.000000e+00> : vector<32xf32>
      %26 = vector.multi_reduction <add>, %25, %cst_18 [1] : vector<32x8xf32> to vector<32xf32>
      %27 = vector.shape_cast %26 : vector<32xf32> to vector<32x1xf32>
      %28 = arith.negf %27 : vector<32x1xf32>
      %29 = math.exp %28 : vector<32x1xf32>
      %cst_19 = arith.constant 1.000000e+00 : f32
      %30 = vector.broadcast %cst_19 : f32 to vector<32x1xf32>
      %31 = arith.addf %30, %29 : vector<32x1xf32>
      %32 = arith.divf %30, %31 : vector<32x1xf32>
      %33 = vector.shape_cast %32 : vector<32x1xf32> to vector<1x32x1xf32>
      %c0_20 = arith.constant 0 : index
      %c0_21 = arith.constant 0 : index
      %c0_22 = arith.constant 0 : index
      %34 = vector.load %arg5[%c0_20, %c0_21, %c0_22] : memref<1x32x1xf32, #tpu.memory_space<vmem>>, vector<1x32x1xf32>
      tpu.vector_store %arg5[%c0_20, %c0_21, %c0_22], %33 {strides = array<i32>} : memref<1x32x1xf32, #tpu.memory_space<vmem>>, vector<1x32x1xf32>,
    } else {
    }
    return
  }
  func.func @transform_0(%arg0: i32, %arg1: i32) -> (i32, i32, i32) {
    %c0_i32 = arith.constant 0 : i32
    %c0_i32_0 = arith.constant 0 : i32
    return %arg0, %c0_i32, %arg1 : i32, i32, i32
  }
  func.func @transform_1(%arg0: i32, %arg1: i32) -> (i32, i32) {
    %c0_i32 = arith.constant 0 : i32
    %c0_i32_0 = arith.constant 0 : i32
    %c0_i32_1 = arith.constant 0 : i32
    return %c0_i32, %c0_i32_0 : i32, i32
  }
  func.func @transform_2(%arg0: i32, %arg1: i32) -> (i32, i32) {
    %c0_i32 = arith.constant 0 : i32
    %c0_i32_0 = arith.constant 0 : i32
    %c0_i32_1 = arith.constant 0 : i32
    return %c0_i32, %c0_i32_0 : i32, i32
  }
  func.func @transform_3(%arg0: i32, %arg1: i32) -> (i32, i32, i32) {
    %c0_i32 = arith.constant 0 : i32
    %c0_i32_0 = arith.constant 0 : i32
    %c0_i32_1 = arith.constant 0 : i32
    return %arg0, %c0_i32, %c0_i32_0 : i32, i32, i32
  }
}

</mosaic_0001>

<llo_original>
// kernel: tpu_custom_call.1
$region0: #{tpu_custom_call.1}
  #allocation0 [shape = 'u32[]', space=smem, size = 0x4, offset = 0x4, fixed_abs, tag = 'smem constant byte address 0x4 - core index']
  #allocation1 [shape = 'u32[144,128]{1,0:T(1,128)}', space=vmem, size = 0x12000, scoped, tag = 'internal scratch']
  #allocation2 [shape = 'f32[32,1]{1,0:T(8,128)}', space=vmem, size = 0x4000, scoped, tag = 'scratch operand']
  %s0 = inlined_call_operand.hbm [shape: f32[2,32,256], index: 0, kind: input, shape index: {}]
  %s1 = inlined_call_operand.vmem [shape: f32[32,8], index: 1, kind: input, shape index: {}]
  %s2 = inlined_call_operand.vmem [shape: f32[32,8], index: 2, kind: input, shape index: {}]
  %s3 = inlined_call_operand.vmem [shape: f32[2,32,1], index: 3, kind: output, shape index: {}]
  %s4 = sld [smem:[#allocation0]]
  $region57: #{tpu_custom_call.1} parent=0
    _
  %s6 = ssub.s32 1, %s4
  %s7 = scalar_select 0, %s6, %s4
  $region1: #{tpu_custom_call.1} parent=0
    #allocation3 [shape = 'u8[65536]{0}', space=vmem, size = 0x10000, scoped, tag = 'input window, operand 0']
    #allocation4 [shape = 's32[2]{0}', space=sflag, size = 0x8, scoped, tag = 'scoped memory for tpu_custom_call.1']
    %8 = vsyncpa [#allocation4], 0
    %s9 = scalar_lea.sflag [#allocation4], 1
    %10 = vsyncpa %s9, 0
    loop: start=0, step=1, limit=4
    $region2: #{tpu_custom_call.1} parent=1 // loop_pre_header
      _
    $region3: #{tpu_custom_call.1} parent=1 // loop_header
      %s12 = sphi 0, %s16
      %p13 = scmp.ge.s32.totalorder %s12, 4
      %s19 = sphi 0, %s31
      %s20 = sphi 0, %s27
      %s21 = sphi 0, %s19
      %s22 = sphi 0, %s20
      %s23 = sphi 0, %s21
      %s24 = sphi 0, %s22
      %s36 = sphi 0, %s38
      %s39 = sphi 0, %s36
      %s40 = sphi 0, %s39
      %s56 = sphi 0, %s40
      %s60 = sphi 0, %s60
      %s62 = sphi 0, %s60
      %s63 = sphi 0, %s62
      %s77 = sphi 0, %s63
      %s81 = sphi 0, %s81
      %s83 = sphi 0, %s81
      %s84 = sphi 0, %s83
      %s98 = sphi 0, %s84
      %s104 = sphi 0, %s106
      %s107 = sphi 0, %s104
      %s108 = sphi 0, %s107
      %s124 = sphi 0, %s108
    $region4: #{tpu_custom_call.1} parent=1 // loop_header_branch
      %15 = sbr.rel (%p13) target = $region8
    $region5: #{tpu_custom_call.1} parent=1 // loop_body
      %s17 = ssub.s32 %s12, 1
      %s18 = ssub.s32 %s12, 2
      %s25 = sadd.s32 1, %s20
      %p26 = scmp.ge.s32.totalorder %s25, 1
      %s27 = scalar_select %p26, 0, %s25
      %s28 = sadd.s32 1, %s19
      %s29 = scalar_select %p26, %s28, %s19
      %p30 = scmp.ge.s32.totalorder %s29, 2
      %s31 = scalar_select %p30, 0, %s29
      %s32 = ssub.s32 %s19, %s31
      %s33 = ssub.s32 %s20, %s27
      %s34 = sor.u32 %s32, %s33
      %p35 = scmp.eq.s32.totalorder %s34, 0
      %s37 = sadd.s32 %s36, 1
      %s38 = scalar_select %p35, %s36, %s37
      %p41 = pneg %p35
      %p42 = scmp.eq.s32.totalorder %s12, 1
      %p43 = por %p41, %p42
      %p44 = scmp.ne.s32.totalorder %s36, %s39
      %p45 = scmp.eq.s32.totalorder %s12, 0
      %p46 = por %p44, %p45
      %p47 = scmp.ne.s32.totalorder %s36, %s39
      %p48 = scmp.eq.s32.totalorder %s17, 1
      %p49 = por %p47, %p48
      %p50 = scmp.ne.s32.totalorder %s39, %s40
      %p51 = scmp.eq.s32.totalorder %s17, 0
      %p52 = por %p50, %p51
      %p53 = scmp.ne.s32.totalorder %s39, %s40
      %p54 = scmp.eq.s32.totalorder %s18, 1
      %p55 = por %p53, %p54
      %p57 = scmp.ne.s32.totalorder %s40, %s56
      %p58 = scmp.eq.s32.totalorder %s18, 0
      %p59 = por %p57, %p58
      %s61 = sadd.s32 %s60, 1
      %p64 = scmp.eq.s32.totalorder %s12, 1
      %p65 = scmp.ne.s32.totalorder %s60, %s62
      %p66 = scmp.eq.s32.totalorder %s12, 0
      %p67 = por %p65, %p66
      %p68 = scmp.ne.s32.totalorder %s60, %s62
      %p69 = scmp.eq.s32.totalorder %s17, 1
      %p70 = por %p68, %p69
      %p71 = scmp.ne.s32.totalorder %s62, %s63
      %p72 = scmp.eq.s32.totalorder %s17, 0
      %p73 = por %p71, %p72
      %p74 = scmp.ne.s32.totalorder %s62, %s63
      %p75 = scmp.eq.s32.totalorder %s18, 1
      %p76 = por %p74, %p75
      %p78 = scmp.ne.s32.totalorder %s63, %s77
      %p79 = scmp.eq.s32.totalorder %s18, 0
      %p80 = por %p78, %p79
      %s82 = sadd.s32 %s81, 1
      %p85 = scmp.eq.s32.totalorder %s12, 1
      %p86 = scmp.ne.s32.totalorder %s81, %s83
      %p87 = scmp.eq.s32.totalorder %s12, 0
      %p88 = por %p86, %p87
      %p89 = scmp.ne.s32.totalorder %s81, %s83
      %p90 = scmp.eq.s32.totalorder %s17, 1
      %p91 = por %p89, %p90
      %p92 = scmp.ne.s32.totalorder %s83, %s84
      %p93 = scmp.eq.s32.totalorder %s17, 0
      %p94 = por %p92, %p93
      %p95 = scmp.ne.s32.totalorder %s83, %s84
      %p96 = scmp.eq.s32.totalorder %s18, 1
      %p97 = por %p95, %p96
      %p99 = scmp.ne.s32.totalorder %s84, %s98
      %p100 = scmp.eq.s32.totalorder %s18, 0
      %p101 = por %p99, %p100
      %s102 = ssub.s32 %s19, %s31
      %p103 = scmp.eq.s32.totalorder %s102, 0
      %s105 = sadd.s32 %s104, 1
      %s106 = scalar_select %p103, %s104, %s105
      %p109 = pneg %p103
      %p110 = scmp.eq.s32.totalorder %s12, 1
      %p111 = por %p109, %p110
      %p112 = scmp.ne.s32.totalorder %s104, %s107
      %p113 = scmp.eq.s32.totalorder %s12, 0
      %p114 = por %p112, %p113
      %p115 = scmp.ne.s32.totalorder %s104, %s107
      %p116 = scmp.eq.s32.totalorder %s17, 1
      %p117 = por %p115, %p116
      %p118 = scmp.ne.s32.totalorder %s107, %s108
      %p119 = scmp.eq.s32.totalorder %s17, 0
      %p120 = por %p118, %p119
      %p121 = scmp.ne.s32.totalorder %s107, %s108
      %p122 = scmp.eq.s32.totalorder %s18, 1
      %p123 = por %p121, %p122
      %p125 = scmp.ne.s32.totalorder %s108, %s124
      %p126 = scmp.eq.s32.totalorder %s18, 0
      %p127 = por %p125, %p126
      %p128 = scmp.le.s32.totalorder 1, %s12
      %p129 = scmp.lt.s32.totalorder %s12, 3
      %p130 = pnand %p128, %p129
      %p131 = pneg %p130
      // Predicated region
      $region9: #{tpu_custom_call.1} parent=5 // pred_check
        _
      $region10: #{tpu_custom_call.1} parent=5 // pred_check_branch
        %133 = sbr.rel (%p130) target = $region12
      $region11: #{tpu_custom_call.1} parent=5 // pred_region
        %s134 = ssub.s32 %s12, 1
        // Predicated region
        $region13: #{tpu_custom_call.1} parent=11 // pred_check
          %p135 = pneg %p73
        $region14: #{tpu_custom_call.1} parent=11 // pred_check_branch
          %137 = sbr.rel (%p135) target = $region16
        $region15: #{tpu_custom_call.1} parent=11 // pred_region
          _
        $region16: #{tpu_custom_call.1} parent=11 // pred_fallthru
          _
        // Predicated region
        $region17: #{tpu_custom_call.1} parent=11 // pred_check
          %p138 = pneg %p94
        $region18: #{tpu_custom_call.1} parent=11 // pred_check_branch
          %140 = sbr.rel (%p138) target = $region20
        $region19: #{tpu_custom_call.1} parent=11 // pred_region
          _
        $region20: #{tpu_custom_call.1} parent=11 // pred_fallthru
          _
      $region12: #{tpu_custom_call.1} parent=5 // pred_fallthru
        _
      %p141 = scmp.lt.s32.totalorder %s12, 2
      // Predicated region
      $region21: #{tpu_custom_call.1} parent=5 // pred_check
        %p142 = pneg %p141
      $region22: #{tpu_custom_call.1} parent=5 // pred_check_branch
        %144 = sbr.rel (%p142) target = $region24
      $region23: #{tpu_custom_call.1} parent=5 // pred_region
        // Predicated region
        $region25: #{tpu_custom_call.1} parent=23 // pred_check
          %p145 = pneg %p46
        $region26: #{tpu_custom_call.1} parent=23 // pred_check_branch
          %147 = sbr.rel (%p145) target = $region28
        $region27: #{tpu_custom_call.1} parent=23 // pred_region
          %s148 = sand.u32 %s36, 1
          %s149 = scalar_lea.sflag [#allocation4], %s148
          %s150 = sand.u32 %s36, 1
          %s151 = smul.addr %s150, 64
          %s152 = scalar_lea.vmem [#allocation3], %s151
          %s153 = smul.u32 2, %s20
          %s155 = ssub.s32 1024, 1024
          %156 = vsyncadd %s149, %s155
          %s157 = smul.addr %s19, 8
          %s158 = sadd.s32 %s153, %s157
          %s159 = smul.addr %s158, 128
          %s160 = scalar_lea.hbm %s0, %s159
          %s161 = sshll.u32 %s152, 4
          %s162 = int_to_ptr.vmem [resolvable:$true] %s161
          %167 = dma.hbm_to_vmem [thread:$0]  %s160, 1024, %s162, %s149, 256, 256, 16
        $region28: #{tpu_custom_call.1} parent=23 // pred_fallthru
          _
      $region24: #{tpu_custom_call.1} parent=5 // pred_fallthru
        _
      %p168 = scmp.le.s32.totalorder 1, %s12
      %p169 = scmp.lt.s32.totalorder %s12, 3
      %p170 = pnand %p168, %p169
      %p171 = pneg %p170
      // Predicated region
      $region29: #{tpu_custom_call.1} parent=5 // pred_check
        _
      $region30: #{tpu_custom_call.1} parent=5 // pred_check_branch
        %173 = sbr.rel (%p170) target = $region32
      $region31: #{tpu_custom_call.1} parent=5 // pred_region
        %s174 = ssub.s32 %s12, 1
        %s175 = sand.u32 %s39, 1
        %s176 = scalar_lea.sflag [#allocation4], %s175
        %s177 = sand.u32 %s39, 1
        %s178 = smul.addr %s177, 64
        %s179 = scalar_lea.vmem [#allocation3], %s178
        // Predicated region
        $region33: #{tpu_custom_call.1} parent=31 // pred_check
          %p180 = pneg %p52
        $region34: #{tpu_custom_call.1} parent=31 // pred_check_branch
          %182 = sbr.rel (%p180) target = $region36
        $region35: #{tpu_custom_call.1} parent=31 // pred_region
          %183 = dma.done %s176, 1024
        $region36: #{tpu_custom_call.1} parent=31 // pred_fallthru
          _
        %s184 = sand.u32 %s39, 1
        %s185 = scalar_lea.sflag [#allocation4], %s184
        %s186 = sand.u32 %s39, 1
        %s187 = smul.addr %s186, 64
        %s188 = scalar_lea.vmem [#allocation3], %s187
        %p189 = pneg %p52
        %p190 = pneg %p49
        %p191 = pneg %p73
        %p192 = pneg %p70
        %p193 = pneg %p94
        %p194 = pneg %p91
        %p195 = pneg %p120
        %p196 = pneg %p117
        %p197 = scmp.lt.s32.totalorder %s21, 1
        %s198 = scalar_select %p197, %s21, 1
        %s199 = smul.addr %s198, 4
        %s200 = smul.addr %s199, 8
        %s201 = scalar_lea.vmem %s3, %s200
        %s202 = smul.u32 2, %s22
        %p203 = scmp.lt.s32.totalorder %s21, 1
        %s204 = scalar_select %p203, %s21, 1
        %s205 = smul.addr %s204, 4
        %s206 = smul.addr %s205, 8
        %s207 = scalar_lea.vmem %s3, %s206
        %p208 = scmp.eq.s32.totalorder %s22, 0
        // Predicated region
        $region37: #{tpu_custom_call.1} parent=31 // pred_check
          %p209 = pneg %p208
        $region38: #{tpu_custom_call.1} parent=31 // pred_check_branch
          %211 = sbr.rel (%p209) target = $region40
        $region39: #{tpu_custom_call.1} parent=31 // pred_region
          %vm212 = vcmask 7168
          %213 = vst.msk [vmem:[#allocation2] sm:$0xff] %vm212, 0.0
          %214 = vst.msk [vmem:[#allocation2 + $0x8] sm:$0xff] %vm212, 0.0
          %215 = vst.msk [vmem:[#allocation2 + $0x10] sm:$0xff] %vm212, 0.0
          %216 = vst.msk [vmem:[#allocation2 + $0x18] sm:$0xff] %vm212, 0.0
        $region40: #{tpu_custom_call.1} parent=31 // pred_fallthru
          _
        %v217 = vld [vmem:[%s179] sm:$0xff]
        %v218 = vld [vmem:[%s179 + $0x8] sm:$0xff]
        %v219 = vld [vmem:[%s179 + $0x10] sm:$0xff]
        %v220 = vld [vmem:[%s179 + $0x18] sm:$0xff]
        %v221 = vld [vmem:[%s179 + $0x20] sm:$0xff]
        %v222 = vld [vmem:[%s179 + $0x28] sm:$0xff]
        %v223 = vld [vmem:[%s179 + $0x30] sm:$0xff]
        %v224 = vld [vmem:[%s179 + $0x38] sm:$0xff]
        %v225 = vld [vmem:[#allocation2] sm:$0xff]
        %v226 = vld [vmem:[#allocation2 + $0x8] sm:$0xff]
        %v227 = vld [vmem:[#allocation2 + $0x10] sm:$0xff]
        %v228 = vld [vmem:[#allocation2 + $0x18] sm:$0xff]
        %v229 = vadd.f32 %v217, %v218
        %230 = vadd.xlane.f32.xlu0 %v229
        %v231 = vpop.xlane.xlu0 %230
        %v232 = vadd.f32 %v219, %v220
        %233 = vadd.xlane.f32.xlu0 %v232
        %v234 = vpop.xlane.xlu0 %233
        %v235 = vadd.f32 %v221, %v222
        %236 = vadd.xlane.f32.xlu0 %v235
        %v237 = vpop.xlane.xlu0 %236
        %v238 = vadd.f32 %v223, %v224
        %239 = vadd.xlane.f32.xlu0 %v238
        %v240 = vpop.xlane.xlu0 %239
        %v241 = vadd.f32 %v225, %v231
        %v242 = vadd.f32 %v226, %v234
        %v243 = vadd.f32 %v227, %v237
        %v244 = vadd.f32 %v228, %v240
        %vm245 = vcmask 7168
        %246 = vst.msk [vmem:[#allocation2] sm:$0xff] %vm245, %v241
        %247 = vst.msk [vmem:[#allocation2 + $0x8] sm:$0xff] %vm245, %v242
        %248 = vst.msk [vmem:[#allocation2 + $0x10] sm:$0xff] %vm245, %v243
        %249 = vst.msk [vmem:[#allocation2 + $0x18] sm:$0xff] %vm245, %v244
        // Predicated region
        $region41: #{tpu_custom_call.1} parent=31 // pred_check
          %p250 = pneg %p208
        $region42: #{tpu_custom_call.1} parent=31 // pred_check_branch
          %252 = sbr.rel (%p250) target = $region44
        $region43: #{tpu_custom_call.1} parent=31 // pred_region
          %v253 = vld [vmem:[#allocation2] sm:$0xff]
          %v254 = vld [vmem:[#allocation2 + $0x8] sm:$0xff]
          %v255 = vld [vmem:[#allocation2 + $0x10] sm:$0xff]
          %v256 = vld [vmem:[#allocation2 + $0x18] sm:$0xff]
          %v257 = vmul.f32 %v253, 0.00390625
          %v258 = vmul.f32 %v254, 0.00390625
          %v259 = vmul.f32 %v255, 0.00390625
          %v260 = vmul.f32 %v256, 0.00390625
          %v261 = vld [vmem:[%s1] sm:$0xff]
          %v262 = vld [vmem:[%s1 + $0x8] sm:$0xff]
          %v263 = vld [vmem:[%s1 + $0x10] sm:$0xff]
          %v264 = vld [vmem:[%s1 + $0x18] sm:$0xff]
          %266 = vset.pattern.permute.xlu0 0
          %267 = vperm.xlu0 %266, %v257
          %v268 = vpop.permute.xlu0 %267
          %271 = vset.pattern.permute.xlu0 0
          %272 = vperm.xlu0 %271, %v258
          %v273 = vpop.permute.xlu0 %272
          %276 = vset.pattern.permute.xlu0 0
          %277 = vperm.xlu0 %276, %v259
          %v278 = vpop.permute.xlu0 %277
          %281 = vset.pattern.permute.xlu0 0
          %282 = vperm.xlu0 %281, %v260
          %v283 = vpop.permute.xlu0 %282
          %v285 = vmul.f32 %v261, %v268
          %v286 = vmul.f32 %v262, %v273
          %v287 = vmul.f32 %v263, %v278
          %v288 = vmul.f32 %v264, %v283
          %vm289 = vcmask 64512
          %v290 = vsel %vm289, %v285, 0.0
          %v291 = vsel %vm289, %v286, 0.0
          %v292 = vadd.f32 %v290, %v291
          %v293 = vsel %vm289, %v287, 0.0
          %v294 = vadd.f32 %v292, %v293
          %v295 = vsel %vm289, %v288, 0.0
          %v296 = vadd.f32 %v294, %v295
          %v297 = vrot.slane %v296, 4
          %v298 = vadd.f32 %v296, %v297
          %v299 = vrot.slane %v298, 2
          %v300 = vadd.f32 %v298, %v299
          %v301 = vrot.slane %v300, 1
          %v302 = vadd.f32 %v300, %v301
          %v303 = vmax.f32 %v302, 0.0
          %v304 = vld [vmem:[%s2] sm:$0xff]
          %v305 = vld [vmem:[%s2 + $0x8] sm:$0xff]
          %v306 = vld [vmem:[%s2 + $0x10] sm:$0xff]
          %v307 = vld [vmem:[%s2 + $0x18] sm:$0xff]
          %v308 = vmul.f32 %v304, %v303
          %v309 = vmul.f32 %v305, %v303
          %v310 = vmul.f32 %v306, %v303
          %v311 = vmul.f32 %v307, %v303
          %v312 = vsel %vm289, %v308, 0.0
          %313 = vadd.xlane.f32.xlu0 %v312
          %v314 = vpop.xlane.xlu0 %313
          %v315 = vsel %vm289, %v309, 0.0
          %316 = vadd.xlane.f32.xlu0 %v315
          %v317 = vpop.xlane.xlu0 %316
          %v318 = vsel %vm289, %v310, 0.0
          %319 = vadd.xlane.f32.xlu0 %v318
          %v320 = vpop.xlane.xlu0 %319
          %v321 = vsel %vm289, %v311, 0.0
          %322 = vadd.xlane.f32.xlu0 %v321
          %v323 = vpop.xlane.xlu0 %322
          %v324 = vxor.u32 %v314, 2147483648
          %v325 = vxor.u32 %v317, 2147483648
          %v326 = vxor.u32 %v320, 2147483648
          %v327 = vxor.u32 %v323, 2147483648
          %v328 = vmul.f32 %v324, 1.442695
          %v329 = vpow.pop %v328
          %v330 = vmul.f32 %v325, 1.442695
          %v331 = vpow.pop %v330
          %v332 = vmul.f32 %v326, 1.442695
          %v333 = vpow.pop %v332
          %v334 = vmul.f32 %v327, 1.442695
          %v335 = vpow.pop %v334
          %v336 = vadd.f32 %v329, 1.0
          %v337 = vadd.f32 %v331, 1.0
          %v338 = vadd.f32 %v333, 1.0
          %v339 = vadd.f32 %v335, 1.0
          %v340 = vrcp.pop %v336
          %v341 = vmul.f32 1.0, %v340
          %v342 = vrcp.pop %v337
          %v343 = vmul.f32 1.0, %v342
          %v344 = vrcp.pop %v338
          %v345 = vmul.f32 1.0, %v344
          %v346 = vrcp.pop %v339
          %v347 = vmul.f32 1.0, %v346
          %348 = vst.msk [vmem:[%s207] sm:$0xff] %vm245, %v341
          %349 = vst.msk [vmem:[%s207 + $0x8] sm:$0xff] %vm245, %v343
          %350 = vst.msk [vmem:[%s207 + $0x10] sm:$0xff] %vm245, %v345
          %351 = vst.msk [vmem:[%s207 + $0x18] sm:$0xff] %vm245, %v347
        $region44: #{tpu_custom_call.1} parent=31 // pred_fallthru
          _
        %p352 = scmp.lt.s32.totalorder %s21, 1
        %s353 = scalar_select %p352, %s21, 1
        %s354 = smul.addr %s353, 4
        %s355 = smul.addr %s354, 8
        %s356 = scalar_lea.vmem %s3, %s355
        // Predicated region
        $region45: #{tpu_custom_call.1} parent=31 // pred_check
          %p357 = pneg %p117
        $region46: #{tpu_custom_call.1} parent=31 // pred_check_branch
          %359 = sbr.rel (%p357) target = $region48
        $region47: #{tpu_custom_call.1} parent=31 // pred_region
          _
        $region48: #{tpu_custom_call.1} parent=31 // pred_fallthru
          _
      $region32: #{tpu_custom_call.1} parent=5 // pred_fallthru
        _
      %p360 = scmp.le.s32.totalorder 2, %s12
      // Predicated region
      $region49: #{tpu_custom_call.1} parent=5 // pred_check
        %p361 = pneg %p360
      $region50: #{tpu_custom_call.1} parent=5 // pred_check_branch
        %363 = sbr.rel (%p361) target = $region52
      $region51: #{tpu_custom_call.1} parent=5 // pred_region
        %s364 = ssub.s32 %s12, 2
        // Predicated region
        $region53: #{tpu_custom_call.1} parent=51 // pred_check
          %p365 = pneg %p123
        $region54: #{tpu_custom_call.1} parent=51 // pred_check_branch
          %367 = sbr.rel (%p365) target = $region56
        $region55: #{tpu_custom_call.1} parent=51 // pred_region
          %p368 = scmp.lt.s32.totalorder %s23, 1
          %s369 = scalar_select %p368, %s23, 1
          %s370 = smul.addr %s369, 4
          %s371 = smul.addr %s370, 8
          %s372 = scalar_lea.vmem %s3, %s371
        $region56: #{tpu_custom_call.1} parent=51 // pred_fallthru
          _
      $region52: #{tpu_custom_call.1} parent=5 // pred_fallthru
        _
    $region6: #{tpu_custom_call.1} parent=1 // loop_footer
      %s16 = sadd.s32 1, %s12
    $region7: #{tpu_custom_call.1} parent=1 // loop_footer_branch
      %11 = sbr.rel target = $region3
    $region8: #{tpu_custom_call.1} parent=1 // loop_exit
      _
    %373 = vsyncpa [#allocation4], 1
    %s374 = scalar_lea.sflag [#allocation4], 1
    %375 = vsyncpa %s374, 1

</llo_original>
